<compile_context>
chip_gen: v7x
topology: tpu7x:2x2x1
jax: 0.10.0
libtpu: 0.0.40
codegen_flags: <defaults>
</compile_context>

<pallas_src>
import math

import jax
import jax.numpy as jnp
from jax import lax
from jax.experimental import pallas as pl
from jax.experimental.pallas import tpu as pltpu


def _round_up(x, n):
    return ((x + n - 1) // n) * n


def _vmem_capacity_bytes():
    try:
        return int(pltpu.get_tpu_info().vmem_capacity_bytes)
    except Exception:
        return 64 << 20  # conservative (v7x) fallback


def arc_margin_kernel(params_ref, x_ref, inv_xn_ref, wt_ref, out_ref, cos_ref):
    """One (C-tile, B-tile) grid step.  No cross-iteration state.

    params_ref : SMEM f32[5] = [s*cos_m, s*sin_m, th, s*mm, s]
    x_ref      : VMEM (tb, D)  bf16 input rows (full feature dim)
    inv_xn_ref : VMEM (tb, 1)  f32  1/max(||x_row||, eps), precomputed
    wt_ref     : VMEM (D, tc)  bf16 unit-norm weight columns (full feature dim)
    out_ref    : VMEM (tb, tc) phi * s
    cos_ref    : VMEM (tb, tc) cosine
    """
    s_cos_m = params_ref[0]
    s_sin_m = params_ref[1]
    th = params_ref[2]
    s_mm = params_ref[3]
    s = params_ref[4]

    # bf16 x bf16 -> f32 accumulate on the MXU.  Weight columns are already
    # unit-norm, so only the (tb, 1) row-norm scale remains in the epilogue.
    dot = jnp.dot(x_ref[...], wt_ref[...], preferred_element_type=jnp.float32)
    cosine = dot * inv_xn_ref[...]

    sine = jnp.sqrt(jnp.maximum(1.0 - cosine * cosine, 0.0))
    out = jnp.where(cosine > th,
                    cosine * s_cos_m - sine * s_sin_m,
                    cosine * s - s_mm)

    out_ref[...] = out.astype(out_ref.dtype)
    cos_ref[...] = cosine.astype(cos_ref.dtype)


class ArcMarginProduct:
    """JAX/Pallas port of the PyTorch ArcMarginProduct module."""

    def __init__(self, in_features, out_features, s=16.0, easy_margin=False,
                 *, key, block_c=2048, block_b=256,
                 out_dtype=jnp.float32, cosine_dtype=jnp.float32):
        self.in_features = in_features
        self.out_features = out_features
        self.s = float(s)
        self.std = 0.1
        self.easy_margin = easy_margin
        self.out_dtype = out_dtype
        self.cosine_dtype = cosine_dtype

        # Xavier-uniform init: U(-a, a), a = sqrt(6 / (fan_in + fan_out)).
        bound = math.sqrt(6.0 / (in_features + out_features))
        w = jax.random.uniform(
            key, (out_features, in_features), jnp.float32, -bound, bound)
        self.weight = w  # f32 master copy (reference / export)

        # Per-generation VMEM budget: ~85% of physical, min 32 MiB headroom for
        # Mosaic internal scratch and the f32 epilogue intermediates.
        cap = _vmem_capacity_bytes()
        self.vmem_budget = max(min(int(cap * 0.85), cap - (12 << 20)), 32 << 20)

        # Tile selection: lane-dense C tiles (multiple of 128), sublane-dense
        # B tiles (multiple of 8).  Shrink tc, then tb, until the
        # double-buffered working set fits the budget.
        out_bytes = (jnp.dtype(out_dtype).itemsize
                     + jnp.dtype(cosine_dtype).itemsize)

        def est(tb_, tc_):
            x_buf = 2 * tb_ * in_features * 2       # bf16 input, double-buffered
            w_buf = 2 * in_features * tc_ * 2       # bf16 weight, double-buffered
            n_buf = 2 * tb_ * 4                     # (tb, 1) row inv-norms
            o_buf = 2 * tb_ * tc_ * out_bytes       # both outputs, double-buffered
            interm = 4 * tb_ * tc_ * 4              # cosine/sine/out f32 temps
            return x_buf + w_buf + n_buf + o_buf + interm

        tc = min(_round_up(out_features, 128), block_c)
        tb = _round_up(block_b, 8)
        while est(tb, tc) > self.vmem_budget and tc > 512:
            tc = max(512, _round_up(tc // 2, 128))
        while est(tb, tc) > self.vmem_budget and tb > 64:
            tb //= 2
        # TODO(synk): for very wide in_features (D*tc still over budget at
        # tc=512) add an inner K grid axis with an f32 VMEM accumulator instead
        # of shrinking tc further.
        self.block_c = tc
        self.block_b_max = tb
        self.c_pad = _round_up(out_features, tc)

        # Bake F.normalize(weight) in f32, transpose to (D, C), zero-pad C and
        # cast to bf16 once.  Valid because the weight is static between calls;
        # if it becomes an externally updated trainable parameter, pass a
        # (1, C) inverse-norm vector per call instead.
        wn = jnp.sqrt(jnp.sum(w * w, axis=1, keepdims=True))
        w_unit = w / jnp.maximum(wn, 1e-12)
        wt = jnp.transpose(w_unit)
        wt = jnp.pad(wt, ((0, 0), (0, self.c_pad - out_features)))
        self.weight_t = wt.astype(jnp.bfloat16)

    def __call__(self, inp, label, m, *, noise_key):
        del label  # unused in the reference forward()

        # m = 1 - m ; m ~ Normal(mean=m, std=0.1)
        m = 1.0 - jnp.asarray(m, jnp.float32)
        m = m + self.std * jax.random.normal(noise_key, (), jnp.float32)

        s = jnp.float32(self.s)
        cos_m = jnp.cos(m)
        sin_m = jnp.sin(m)
        if self.easy_margin:
            # where(cosine > 0, phi, cosine) == th=0, mm=0 path.
            th = jnp.float32(0.0)
            mm = jnp.float32(0.0)
        else:
            th = jnp.cos(jnp.pi - m)
            mm = jnp.sin(jnp.pi - m) * m
        # Pre-scale by s so the kernel never needs a separate phi*s pass.
        params = jnp.stack(
            [s * cos_m, s * sin_m, th, s * mm, s]).astype(jnp.float32)

        x = jnp.asarray(inp, jnp.float32)
        B, D = x.shape
        assert D == self.in_features
        C = self.out_features

        tb = min(_round_up(B, 8), self.block_b_max)
        b_pad = _round_up(B, tb)
        if b_pad != B:
            x = jnp.pad(x, ((0, b_pad - B), (0, 0)))

        # Row reciprocal norms once, in f32, outside the kernel (otherwise they
        # would be recomputed for every C tile).  rsqrt(max(ss, eps^2)) keeps
        # F.normalize's x / max(||x||, eps) semantics, eps = 1e-12.
        inv_xn = lax.rsqrt(jnp.maximum(
            jnp.sum(x * x, axis=1, keepdims=True), jnp.float32(1e-24)))
        x_bf16 = x.astype(jnp.bfloat16)

        tc = self.block_c
        c_pad = self.c_pad
        grid = (c_pad // tc, b_pad // tb)  # batch innermost -> weight-block reuse

        out_p, cos_p = pl.pallas_call(
            arc_margin_kernel,
            out_shape=(
                jax.ShapeDtypeStruct((b_pad, c_pad), self.out_dtype),
                jax.ShapeDtypeStruct((b_pad, c_pad), self.cosine_dtype),
            ),
            grid=grid,
            in_specs=[
                pl.BlockSpec(memory_space=pltpu.MemorySpace.SMEM),   # scalars
                pl.BlockSpec((tb, D), lambda j, i: (i, 0)),          # x (bf16)
                pl.BlockSpec((tb, 1), lambda j, i: (i, 0)),          # 1/||x||
                pl.BlockSpec((D, tc), lambda j, i: (0, j)),          # W^T unit cols
            ],
            out_specs=(
                pl.BlockSpec((tb, tc), lambda j, i: (i, j)),
                pl.BlockSpec((tb, tc), lambda j, i: (i, j)),
            ),
            compiler_params=pltpu.CompilerParams(
                # No cross-iteration state -> both axes independent (megacore
                # sharding on v7x; no-op on single-TC v5e/v6e).
                dimension_semantics=("parallel", "parallel"),
                vmem_limit_bytes=self.vmem_budget,
            ),
        )(params, x_bf16, inv_xn, self.weight_t)

        return out_p[:B, :C], cos_p[:B, :C]


if __name__ == "__main__":
    key = jax.random.PRNGKey(0)
    k_w, k_x, k_lbl, k_noise = jax.random.split(key, 4)

    batch = 6
    in_features = 32
    out_features = 200  # not a multiple of 128 -> exercises the C padding path

    module = ArcMarginProduct(in_features, out_features, s=16.0,
                              easy_margin=False, key=k_w)

    x = jax.random.normal(k_x, (batch, in_features), jnp.float32)
    label = jax.random.randint(k_lbl, (batch,), 0, out_features)  # unused
    m = jnp.float32(0.3)

    output, cosine = module(x, label, m, noise_key=k_noise)
    jax.block_until_ready((output, cosine))

    assert output.shape == (batch, out_features)
    assert cosine.shape == (batch, out_features)

    # Pure-JAX f32 reference with the exact same stochastic margin (same key).
    m_ref = 1.0 - jnp.float32(0.3)
    m_ref = m_ref + module.std * jax.random.normal(k_noise, (), jnp.float32)
    w_ref = module.weight  # original f32 weight, (C, D)
    x_n = x / jnp.maximum(
        jnp.sqrt(jnp.sum(x * x, axis=1, keepdims=True)), 1e-12)
    w_n = w_ref / jnp.maximum(
        jnp.sqrt(jnp.sum(w_ref * w_ref, axis=1, keepdims=True)), 1e-12)
    cos_ref = jnp.dot(x_n, w_n.T, precision=lax.Precision.HIGHEST)
    sin_ref = jnp.sqrt(jnp.clip(1.0 - cos_ref * cos_ref, 0.0, 1.0))
    phi_ref = cos_ref * jnp.cos(m_ref) - sin_ref * jnp.sin(m_ref)
    phi_ref = jnp.where(cos_ref > jnp.cos(jnp.pi - m_ref),
                        phi_ref, cos_ref - jnp.sin(jnp.pi - m_ref) * m_ref)
    out_ref = phi_ref * module.s

    # bf16 MXU operands -> looser tolerances than the previous f32 kernel.
    assert jnp.allclose(cosine.astype(jnp.float32), cos_ref,
                        atol=1e-2, rtol=1e-2)
    assert jnp.allclose(output.astype(jnp.float32), out_ref,
                        atol=2.5e-1, rtol=2e-2)

    print("KERNEL_OK")
</pallas_src>

<mosaic_0001>
module attributes {stable_mosaic.version = 11 : i64} {
  func.func @arc_margin_kernel(%arg0: i32, %arg1: i32, %arg2: memref<5xf32, #tpu.memory_space<smem>>, %arg3: memref<8x32xbf16, #tpu.memory_space<vmem>>, %arg4: memref<8x1xf32, #tpu.memory_space<vmem>>, %arg5: memref<32x256xbf16, #tpu.memory_space<vmem>>, %arg6: memref<8x256xf32, #tpu.memory_space<vmem>>, %arg7: memref<8x256xf32, #tpu.memory_space<vmem>>) attributes {dimension_semantics = [#tpu.dimension_semantics<parallel>, #tpu.dimension_semantics<parallel>], iteration_bounds = array<i64: 1, 1>, scalar_prefetch = 0 : i64, scratch_operands = 0 : i64, tpu.core_type = #tpu.core_type<tc>, window_params = [{transform_indices = @transform_0, window_bounds = array<i64: 5>}, {transform_indices = @transform_1, window_bounds = array<i64: 8, 32>}, {transform_indices = @transform_2, window_bounds = array<i64: 8, 1>}, {transform_indices = @transform_3, window_bounds = array<i64: 32, 256>}, {transform_indices = @transform_4, window_bounds = array<i64: 8, 256>}, {transform_indices = @transform_5, window_bounds = array<i64: 8, 256>}]} {
    %c0 = arith.constant 0 : index
    %0 = memref.load %arg2[%c0] : memref<5xf32, #tpu.memory_space<smem>>
    %c1 = arith.constant 1 : index
    %1 = memref.load %arg2[%c1] : memref<5xf32, #tpu.memory_space<smem>>
    %c2 = arith.constant 2 : index
    %2 = memref.load %arg2[%c2] : memref<5xf32, #tpu.memory_space<smem>>
    %c3 = arith.constant 3 : index
    %3 = memref.load %arg2[%c3] : memref<5xf32, #tpu.memory_space<smem>>
    %c4 = arith.constant 4 : index
    %4 = memref.load %arg2[%c4] : memref<5xf32, #tpu.memory_space<smem>>
    %c0_0 = arith.constant 0 : index
    %c0_1 = arith.constant 0 : index
    %5 = vector.load %arg3[%c0_0, %c0_1] : memref<8x32xbf16, #tpu.memory_space<vmem>>, vector<8x32xbf16>
    %c0_2 = arith.constant 0 : index
    %c0_3 = arith.constant 0 : index
    %6 = vector.load %arg5[%c0_2, %c0_3] : memref<32x256xbf16, #tpu.memory_space<vmem>>, vector<32x256xbf16>
    %cst = arith.constant dense<0.000000e+00> : vector<8x256xf32>
    %7 = tpu.matmul %5, %6, %cst {dimension_numbers = #tpu.dot_dimension_numbers<[1], [0], [0], [1], [0, 0, 1, 1], [], []>} : vector<8x32xbf16>, vector<32x256xbf16>, vector<8x256xf32> -> vector<8x256xf32>
    %c0_4 = arith.constant 0 : index
    %c0_5 = arith.constant 0 : index
    %8 = vector.load %arg4[%c0_4, %c0_5] : memref<8x1xf32, #tpu.memory_space<vmem>>, vector<8x1xf32>
    %9 = vector.broadcast %8 : vector<8x1xf32> to vector<8x256xf32>
    %10 = arith.mulf %7, %9 : vector<8x256xf32>
    %11 = arith.mulf %10, %10 : vector<8x256xf32>
    %cst_6 = arith.constant 1.000000e+00 : f32
    %12 = vector.broadcast %cst_6 : f32 to vector<8x256xf32>
    %13 = arith.subf %12, %11 : vector<8x256xf32>
    %cst_7 = arith.constant 0.000000e+00 : f32
    %14 = vector.broadcast %cst_7 : f32 to vector<8x256xf32>
    %15 = arith.maximumf %13, %14 : vector<8x256xf32>
    %16 = math.sqrt %15 : vector<8x256xf32>
    %17 = vector.broadcast %2 : f32 to vector<8x256xf32>
    %18 = arith.cmpf ogt, %10, %17 : vector<8x256xf32>
    %19 = vector.broadcast %0 : f32 to vector<8x256xf32>
    %20 = arith.mulf %10, %19 : vector<8x256xf32>
    %21 = vector.broadcast %1 : f32 to vector<8x256xf32>
    %22 = arith.mulf %16, %21 : vector<8x256xf32>
    %23 = arith.subf %20, %22 : vector<8x256xf32>
    %24 = vector.broadcast %4 : f32 to vector<8x256xf32>
    %25 = arith.mulf %10, %24 : vector<8x256xf32>
    %26 = vector.broadcast %3 : f32 to vector<8x256xf32>
    %27 = arith.subf %25, %26 : vector<8x256xf32>
    %28 = arith.select %18, %23, %27 : vector<8x256xi1>, vector<8x256xf32>
    %c0_8 = arith.constant 0 : index
    %c0_9 = arith.constant 0 : index
    %29 = vector.load %arg6[%c0_8, %c0_9] : memref<8x256xf32, #tpu.memory_space<vmem>>, vector<8x256xf32>
    tpu.vector_store %arg6[%c0_8, %c0_9], %28 {strides = array<i32>} : memref<8x256xf32, #tpu.memory_space<vmem>>, vector<8x256xf32>,
    %c0_10 = arith.constant 0 : index
    %c0_11 = arith.constant 0 : index
    %30 = vector.load %arg7[%c0_10, %c0_11] : memref<8x256xf32, #tpu.memory_space<vmem>>, vector<8x256xf32>
    tpu.vector_store %arg7[%c0_10, %c0_11], %10 {strides = array<i32>} : memref<8x256xf32, #tpu.memory_space<vmem>>, vector<8x256xf32>,
    return
  }
  func.func @transform_0(%arg0: i32, %arg1: i32) -> i32 {
    %c0_i32 = arith.constant 0 : i32
    %c0_i32_0 = arith.constant 0 : i32
    return %c0_i32 : i32
  }
  func.func @transform_1(%arg0: i32, %arg1: i32) -> (i32, i32) {
    %c0_i32 = arith.constant 0 : i32
    %c0_i32_0 = arith.constant 0 : i32
    return %arg1, %c0_i32 : i32, i32
  }
  func.func @transform_2(%arg0: i32, %arg1: i32) -> (i32, i32) {
    %c0_i32 = arith.constant 0 : i32
    %c0_i32_0 = arith.constant 0 : i32
    return %arg1, %c0_i32 : i32, i32
  }
  func.func @transform_3(%arg0: i32, %arg1: i32) -> (i32, i32) {
    %c0_i32 = arith.constant 0 : i32
    %c0_i32_0 = arith.constant 0 : i32
    return %c0_i32, %arg0 : i32, i32
  }
  func.func @transform_4(%arg0: i32, %arg1: i32) -> (i32, i32) {
    %c0_i32 = arith.constant 0 : i32
    return %arg1, %arg0 : i32, i32
  }
  func.func @transform_5(%arg0: i32, %arg1: i32) -> (i32, i32) {
    %c0_i32 = arith.constant 0 : i32
    return %arg1, %arg0 : i32, i32
  }
}

</mosaic_0001>

<llo_original>
// kernel: tpu_custom_call.1
$region0: #{tpu_custom_call.1}
  #allocation0 [shape = 'u32[]', space=smem, size = 0x4, offset = 0x4, fixed_abs, tag = 'smem constant byte address 0x4 - core index']
  #allocation1 [shape = 'u32[144,128]{1,0:T(1,128)}', space=vmem, size = 0x12000, scoped, tag = 'internal scratch']
  %s0 = inlined_call_operand.vmem [shape: f32[5], index: 0, kind: input, shape index: {}]
  %s1 = inlined_call_operand.vmem [shape: bf16[8,32], index: 1, kind: input, shape index: {}]
  %s2 = inlined_call_operand.vmem [shape: f32[8,1], index: 2, kind: input, shape index: {}]
  %s3 = inlined_call_operand.hbm [shape: bf16[32,256], index: 3, kind: input, shape index: {}]
  %s4 = inlined_call_operand.hbm [shape: f32[8,256], index: 4, kind: output, shape index: {0}]
  %s5 = inlined_call_operand.hbm [shape: f32[8,256], index: 5, kind: output, shape index: {1}]
  %6 = xla_tuple %s4, %s5
  %s7 = sld [smem:[#allocation0]]
  $region42: #{tpu_custom_call.1} parent=0
    _
  %s9 = ssub.s32 1, %s7
  %s10 = scalar_select 0, %s9, %s7
  $region1: #{tpu_custom_call.1} parent=0
    #allocation2 [shape = 'u8[512]{0}', space=smem, size = 0x200, scoped, tag = 'input window, operand 0, single buffered']
    #allocation3 [shape = 's32[1]{0}', space=sflag, size = 0x4, scoped, tag = 'scoped memory for tpu_custom_call.1']
    #allocation4 [shape = 's32[1]{0}', space=sflag, size = 0x4, scoped, tag = 'scoped memory for tpu_custom_call.1']
    #allocation5 [shape = 's32[1]{0}', space=sflag, size = 0x4, scoped, tag = 'scoped memory for tpu_custom_call.1']
    #allocation6 [shape = 'u8[16384]{0}', space=vmem, size = 0x4000, scoped, tag = 'input window, operand 3, single buffered']
    #allocation7 [shape = 'u8[8192]{0}', space=vmem, size = 0x2000, scoped, tag = 'output window, operand 0, single buffered']
    #allocation8 [shape = 'u8[8192]{0}', space=vmem, size = 0x2000, scoped, tag = 'output window, operand 1, single buffered']
    #allocation9 [shape = 's32[1]{0}', space=sflag, size = 0x4, scoped, tag = 'scoped memory for tpu_custom_call.1']
    %11 = vsyncpa [#allocation5], 0
    %12 = vsyncpa [#allocation3], 0
    %13 = vsyncpa [#allocation4], 0
    %14 = vsyncpa [#allocation9], 0
    // Predicated region
    $region2: #{tpu_custom_call.1} parent=1 // pred_check
      _
    $region3: #{tpu_custom_call.1} parent=1 // pred_check_branch
      %16 = sbr.rel (0) target = $region5
    $region4: #{tpu_custom_call.1} parent=1 // pred_region
      %s18 = ssub.s32 16, 16
      %19 = vsyncadd [#allocation5], %s18
      %s21 = sshll.u32 %s0, 4
      %s22 = int_to_ptr.vmem [resolvable:$true] %s21
      %24 = dma.vmem_to_smem %s22, 16, [#allocation2], [#allocation5]
    $region5: #{tpu_custom_call.1} parent=1 // pred_fallthru
      _
    // Predicated region
    $region6: #{tpu_custom_call.1} parent=1 // pred_check
      _
    $region7: #{tpu_custom_call.1} parent=1 // pred_check_branch
      %26 = sbr.rel (0) target = $region9
    $region8: #{tpu_custom_call.1} parent=1 // pred_region
      _
    $region9: #{tpu_custom_call.1} parent=1 // pred_fallthru
      _
    // Predicated region
    $region10: #{tpu_custom_call.1} parent=1 // pred_check
      _
    $region11: #{tpu_custom_call.1} parent=1 // pred_check_branch
      %28 = sbr.rel (0) target = $region13
    $region12: #{tpu_custom_call.1} parent=1 // pred_region
      _
    $region13: #{tpu_custom_call.1} parent=1 // pred_fallthru
      _
    // Predicated region
    $region14: #{tpu_custom_call.1} parent=1 // pred_check
      _
    $region15: #{tpu_custom_call.1} parent=1 // pred_check_branch
      %30 = sbr.rel (0) target = $region17
    $region16: #{tpu_custom_call.1} parent=1 // pred_region
      %s32 = ssub.s32 512, 512
      %33 = vsyncadd [#allocation3], %s32
      %s34 = sshll.u32 [#allocation6], 4
      %s35 = int_to_ptr.vmem [resolvable:$true] %s34
      %40 = dma.hbm_to_vmem [thread:$0]  %s3, 512, %s35, [#allocation3], 128, 128, 8
    $region17: #{tpu_custom_call.1} parent=1 // pred_fallthru
      _
    // Predicated region
    $region18: #{tpu_custom_call.1} parent=1 // pred_check
      _
    $region19: #{tpu_custom_call.1} parent=1 // pred_check_branch
      %42 = sbr.rel (0) target = $region21
    $region20: #{tpu_custom_call.1} parent=1 // pred_region
      %43 = dma.done [#allocation5], 16
    $region21: #{tpu_custom_call.1} parent=1 // pred_fallthru
      _
    // Predicated region
    $region22: #{tpu_custom_call.1} parent=1 // pred_check
      _
    $region23: #{tpu_custom_call.1} parent=1 // pred_check_branch
      %45 = sbr.rel (0) target = $region25
    $region24: #{tpu_custom_call.1} parent=1 // pred_region
      %46 = dma.done [#allocation3], 512
    $region25: #{tpu_custom_call.1} parent=1 // pred_fallthru
      _
    %47 = sfence
    %s49 = sld [smem:[#allocation2]]
    %s50 = sld [smem:[#allocation2 + $0x1]]
    %s51 = sld [smem:[#allocation2 + $0x2]]
    %s52 = sld [smem:[#allocation2 + $0x3]]
    %s53 = sld [smem:[#allocation2 + $0x4]]
    %v54 = vld [vmem:[%s1] sm:$0xf]
    %v55 = vld [vmem:[#allocation6] sm:$0xff]
    %v56 = vld [vmem:[#allocation6 + $0x8] sm:$0xff]
    %v57 = vld [vmem:[#allocation6 + $0x10] sm:$0xff]
    %v58 = vld [vmem:[#allocation6 + $0x18] sm:$0xff]
    %v63 = vunpack.c.l.b16 %v55
    %v64 = vunpack.c.h.b16 %v55
    %v65 = vunpack.c.l.b16 %v56
    %v66 = vunpack.c.h.b16 %v56
    %v67 = vunpack.c.l.b16 %v57
    %v68 = vunpack.c.h.b16 %v57
    %v69 = vunpack.c.l.b16 %v58
    %v70 = vunpack.c.h.b16 %v58
    %v71 = vpack.c.b16 %v65, %v63
    %v72 = vpack.c.b16 %v66, %v64
    %v73 = vpack.c.b16 %v69, %v67
    %v74 = vpack.c.b16 %v70, %v68
    %vm79 = vcmask 261120
    %v81 = vsel %vm79, %v54, 0
    %83 = vmatprep.subr.bf16.mxu0 %v72
    %84 = vmatpush1.bf16.msra.mxu0 %v71
    %85 = vmatprep.subr.bf16.mxu0 %v74
    %86 = vmatpush1.bf16.msra.mxu0 %v73
    %87 = vmatprep.subr.bf16.mxu0 0
    %88 = vmatpush1.bf16.msra.mxu0 0
    %89 = vmatprep.subr.bf16.mxu0 0
    %90 = vmatpush1.bf16.msra.mxu0 0
    %91 = vmatprep.subr.bf16.mxu0 0
    %92 = vmatpush1.bf16.msra.mxu0 0
    %93 = vmatprep.subr.bf16.mxu0 0
    %94 = vmatpush1.bf16.msra.mxu0 0
    %95 = vmatprep.subr.bf16.mxu0 0
    %96 = vmatpush1.bf16.msra.mxu0 0
    %97 = vmatprep.subr.bf16.mxu0 0
    %98 = vmatpush1.bf16.msra.mxu0 0
    %99 = vmatprep.subr.bf16.mxu0 0
    %100 = vmatpush1.bf16.msra.mxu0 0
    %101 = vmatprep.subr.bf16.mxu0 0
    %102 = vmatpush1.bf16.msra.mxu0 0
    %103 = vmatprep.subr.bf16.mxu0 0
    %104 = vmatpush1.bf16.msra.mxu0 0
    %105 = vmatprep.subr.bf16.mxu0 0
    %106 = vmatpush1.bf16.msra.mxu0 0
    %107 = vmatprep.subr.bf16.mxu0 0
    %108 = vmatpush1.bf16.msra.mxu0 0
    %109 = vmatprep.subr.bf16.mxu0 0
    %110 = vmatpush1.bf16.msra.mxu0 0
    %111 = vmatprep.subr.bf16.mxu0 0
    %112 = vmatpush1.bf16.msra.mxu0 0
    %113 = vmatprep.subr.bf16.mxu0 0
    %114 = vmatpush1.bf16.msra.mxu0 0
    %115 = vmatprep.mubr.bf16.mxu0 0
    %116 = vmatmul.mubr.bf16.gmra.mrb[0].mxu0 %v81
    %v117 = vpop.f32.mrb[0].mxu0
    %v118 = vadd.f32 0.0, %v117
    %v119 = vpop.f32.mrb[0].mxu0
    %v120 = vadd.f32 0.0, %v119
    %v121 = vpop.f32.mrb[0].mxu0
    %v122 = vpop.f32.mrb[0].mxu0
    %123 = vdwg.mxu0
    %v124 = vld [vmem:[%s2] sm:$0xff]
    %126 = vset.pattern.permute.xlu0 0
    %127 = vperm.xlu0 %126, %v124
    %v128 = vpop.permute.xlu0 %127
    %v130 = vmul.f32 %v118, %v128
    %v131 = vmul.f32 %v120, %v128
    %v132 = vmul.f32 %v130, %v130
    %v133 = vmul.f32 %v131, %v131
    %v134 = vsub.f32 1.0, %v132
    %v135 = vsub.f32 1.0, %v133
    %v136 = vmax.f32 %v134, 0.0
    %v137 = vmax.f32 %v135, 0.0
    %v138 = vrsqrt.pop %v136
    %v139 = vmul.f32 %v136, %v138
    %vm140 = vcmp.eq.f32.partialorder %v136, inf
    %v141 = vsel %vm140, %v136, %v139
    %vm142 = vcmp.eq.f32.partialorder %v136, 0.0
    %v143 = vand.u32 %v136, 2147483648
    %v144 = vsel %vm142, %v143, %v141
    %v145 = vrsqrt.pop %v137
    %v146 = vmul.f32 %v137, %v145
    %vm147 = vcmp.eq.f32.partialorder %v137, inf
    %v148 = vsel %vm147, %v137, %v146
    %vm149 = vcmp.eq.f32.partialorder %v137, 0.0
    %v150 = vand.u32 %v137, 2147483648
    %v151 = vsel %vm149, %v150, %v148
    %v152 = vstv %s51
    %vm153 = vcmp.gt.f32.partialorder %v130, %v152
    %vm154 = vcmp.gt.f32.partialorder %v131, %v152
    %v155 = vstv %s49
    %v156 = vmul.f32 %v130, %v155
    %v157 = vmul.f32 %v131, %v155
    %v158 = vstv %s50
    %v159 = vmul.f32 %v144, %v158
    %v160 = vmul.f32 %v151, %v158
    %v161 = vsub.f32 %v156, %v159
    %v162 = vsub.f32 %v157, %v160
    %v163 = vstv %s53
    %v164 = vmul.f32 %v130, %v163
    %v165 = vmul.f32 %v131, %v163
    %v166 = vstv %s52
    %v167 = vsub.f32 %v164, %v166
    %v168 = vsub.f32 %v165, %v166
    %v169 = vsel %vm153, %v161, %v167
    %v170 = vsel %vm154, %v162, %v168
    %171 = vst [vmem:[#allocation7] sm:$0xff] %v169
    %172 = vst [vmem:[#allocation7 + $0x8] sm:$0xff] %v170
    %173 = vst [vmem:[#allocation8] sm:$0xff] %v130
    %174 = vst [vmem:[#allocation8 + $0x8] sm:$0xff] %v131
    // Predicated region
    $region26: #{tpu_custom_call.1} parent=1 // pred_check
      _
    $region27: #{tpu_custom_call.1} parent=1 // pred_check_branch
      %176 = sbr.rel (0) target = $region29
    $region28: #{tpu_custom_call.1} parent=1 // pred_region
      %s178 = ssub.s32 256, 256
      %179 = vsyncadd [#allocation4], %s178
      %s181 = sshll.u32 [#allocation7], 4
      %s182 = int_to_ptr.vmem [resolvable:$true] %s181
      %184 = dma.vmem_to_hbm [thread:$0]  %s182, 256, %s4, [#allocation4]
    $region29: #{tpu_custom_call.1} parent=1 // pred_fallthru
      _
    // Predicated region
    $region30: #{tpu_custom_call.1} parent=1 // pred_check
      _
    $region31: #{tpu_custom_call.1} parent=1 // pred_check_branch
      %186 = sbr.rel (0) target = $region33
    $region32: #{tpu_custom_call.1} parent=1 // pred_region
      %s188 = ssub.s32 256, 256
      %189 = vsyncadd [#allocation9], %s188
      %s191 = sshll.u32 [#allocation8], 4
      %s192 = int_to_ptr.vmem [resolvable:$true] %s191
      %194 = dma.vmem_to_hbm [thread:$0]  %s192, 256, %s5, [#allocation9]
    $region33: #{tpu_custom_call.1} parent=1 // pred_fallthru
      _
    // Predicated region
    $region34: #{tpu_custom_call.1} parent=1 // pred_check
      _
    $region35: #{tpu_custom_call.1} parent=1 // pred_check_branch
      %196 = sbr.rel (0) target = $region37
    $region36: #{tpu_custom_call.1} parent=1 // pred_region
      %197 = dma.done [#allocation4], 256
    $region37: #{tpu_custom_call.1} parent=1 // pred_fallthru
      _
    // Predicated region
    $region38: #{tpu_custom_call.1} parent=1 // pred_check
      _
    $region39: #{tpu_custom_call.1} parent=1 // pred_check_branch
      %199 = sbr.rel (0) target = $region41
    $region40: #{tpu_custom_call.1} parent=1 // pred_region
      %200 = dma.done [#allocation9], 256
    $region41: #{tpu_custom_call.1} parent=1 // pred_fallthru
      _
    %201 = vsyncpa [#allocation3], 1
    %202 = vsyncpa [#allocation4], 1
    %203 = vsyncpa [#allocation9], 1
    %204 = vsyncpa [#allocation5], 1

</llo_original>
